<compile_context>
chip_gen: v6e
topology: v6e:2x2x1
jax: 0.10.0
libtpu: 0.0.40
codegen_flags: <defaults>
</compile_context>

<pallas_src>
import math

import jax
import jax.numpy as jnp
from jax import lax
from jax.experimental import pallas as pl
from jax.experimental.pallas import tpu as pltpu


# ----------------------------- generation params --------------------------- #

def _gen_params():
    """Per-TPU-generation block budget, scoped-VMEM cap and min grid steps."""
    try:
        kind = jax.devices()[0].device_kind.lower()
    except Exception:  # pragma: no cover - defensive
        kind = ""
    if "v7" in kind:
        # 64 MiB physical VMEM, 3.2 TB/s HBM, 2 TensorCores.
        return dict(block_bytes=4 << 20, vmem_cap=48 << 20, min_grid_steps=2)
    if "v6" in kind:
        # 128 MiB VMEM, 1 TC.
        return dict(block_bytes=4 << 20, vmem_cap=96 << 20, min_grid_steps=1)
    if "v5" in kind and ("lite" in kind or "v5e" in kind):
        # v5e: 128 MiB VMEM but slower HBM; 2 MiB is already past the knee.
        return dict(block_bytes=2 << 20, vmem_cap=96 << 20, min_grid_steps=1)
    if "v5" in kind or "v4" in kind:
        # v5p / v4: 128 MiB VMEM, megacore (2 TCs).
        return dict(block_bytes=4 << 20, vmem_cap=96 << 20, min_grid_steps=2)
    # Unknown generation: conservative (v7x-safe) settings.
    return dict(block_bytes=2 << 20, vmem_cap=48 << 20, min_grid_steps=1)


# ----------------------------- helpers ------------------------------------ #

def _divisors(n):
    out = set()
    d = 1
    while d * d <= n:
        if n % d == 0:
            out.add(d)
            out.add(n // d)
        d += 1
    return sorted(out)


def _largest_divisor_leq(n, limit):
    best = 1
    for d in _divisors(n):
        if d <= limit:
            best = d
    return best


def _compiler_params(grid_len, block_bytes, vmem_cap):
    kwargs = {"dimension_semantics": ("parallel",) * grid_len}
    # Auto-pipelining double-buffers input and output blocks (~4x), plus a
    # little slack for any in-kernel VMEM intermediate.
    need = 5 * block_bytes + (2 << 20)
    if need > 12 * 1024 * 1024:
        kwargs["vmem_limit_bytes"] = int(min(need, vmem_cap))
    return pltpu.CompilerParams(**kwargs)


def _cost(nbytes):
    # Pure copy: read everything once, write everything once.
    return pl.CostEstimate(flops=0, transcendentals=0, bytes_accessed=2 * nbytes)


# ----------------------------- kernels ------------------------------------ #

def _minor_transpose_kernel(x_ref, o_ref):
    # (TB, tm, tn) -> (TB, tn, tm): true minor-axes transpose (XLU).
    o_ref[...] = jnp.swapaxes(x_ref[...], -1, -2)


def _make_block_permute_kernel(tc1, tc2):
    """Block-local permute (1,TC1,1,TC2,TP,W) -> (1,TC2,1,TC1,TP,W).

    Minor (sublane/lane) dims are unchanged, so this is a strided VMEM slab
    copy, never an XLU transpose.  Degenerates to a free size-1-axis reshape
    when one of the batched dims is 1 (the axis swap itself is done by the
    permuted output index_map / block placement).
    """
    if tc1 == 1 or tc2 == 1:
        def kernel(x_ref, o_ref):
            o_ref[...] = x_ref[...].reshape(o_ref.shape)
        return kernel

    if tc1 <= tc2:
        n = tc1

        def copy_one(x_ref, o_ref, i):
            o_ref[0, :, 0, i, :, :] = x_ref[0, i, 0, :, :, :]
    else:
        n = tc2

        def copy_one(x_ref, o_ref, j):
            o_ref[0, j, 0, :, :, :] = x_ref[0, :, 0, j, :, :]

    if n <= 16:
        def kernel(x_ref, o_ref):
            for i in range(n):
                copy_one(x_ref, o_ref, i)
    else:
        def kernel(x_ref, o_ref):
            def body(i, carry):
                copy_one(x_ref, o_ref, i)
                return carry
            lax.fori_loop(0, n, body, 0, unroll=4)
    return kernel


def _make_slab_transpose_kernel(d1, tc):
    """Block-local permute (1,D1,1,TC,T) -> (1,TC,1,D1,T) (lane dim T fixed)."""
    if d1 <= tc:
        n = d1

        def copy_one(x_ref, o_ref, i):
            o_ref[0, :, 0, i, :] = x_ref[0, i, 0, :, :]
    else:
        n = tc

        def copy_one(x_ref, o_ref, j):
            o_ref[0, j, 0, :, :] = x_ref[0, :, 0, j, :]

    if n <= 16:
        def kernel(x_ref, o_ref):
            for i in range(n):
                copy_one(x_ref, o_ref, i)
    else:
        def kernel(x_ref, o_ref):
            def body(i, carry):
                copy_one(x_ref, o_ref, i)
                return carry
            lax.fori_loop(0, n, body, 0, unroll=4)
    return kernel


# ----------------------------- case A (non-minor swap) --------------------- #

def _transpose_major(x, d1, d2, out_shape, max_block_bytes, vmem_cap,
                     min_grid_steps):
    shp = x.shape
    isz = jnp.dtype(x.dtype).itemsize
    nbytes = x.size * isz
    A = math.prod(shp[:d1])
    D1 = shp[d1]
    Mdl = math.prod(shp[d1 + 1:d2])
    D2 = shp[d2]
    trailing = shp[d2 + 1:]          # non-empty (d2 <= nd - 2)
    T = math.prod(trailing)
    W = shp[-1]
    P = T // W
    sub = max(8, 32 // isz)          # sublane multiple for this dtype

    lane_dense = (W % 128 == 0)

    # 5-D collapsed path: only worth it when W is lane-sparse but the collapsed
    # trailing axis T is itself lane-dense (otherwise stores stay masked and we
    # gain nothing over the 6-D path).
    use_5d = False
    valid_tc = None
    if (not lane_dense) and (T % 128 == 0):
        valid_tc = [d for d in _divisors(D2) if d % sub == 0 or d == D2]
        min_block5 = D1 * min(valid_tc) * T * isz
        use_5d = min_block5 <= 2 * max_block_bytes

    if use_5d:
        fit = [d for d in valid_tc if D1 * d * T * isz <= max_block_bytes]
        TC = max(fit) if fit else min(valid_tc)
        # Keep >= min_grid_steps grid steps so both TensorCores get work.
        if min_grid_steps > 1 and A * Mdl * (D2 // TC) < min_grid_steps:
            alt = [d for d in valid_tc if d <= D2 // min_grid_steps]
            if alt:
                TC = max(alt)
        block_bytes = D1 * TC * T * isz

        x5 = x.reshape(A, D1, Mdl, D2, T)
        grid = (A, Mdl, D2 // TC)    # inner axis walks contiguous D2 chunks
        out5 = pl.pallas_call(
            _make_slab_transpose_kernel(D1, TC),
            out_shape=jax.ShapeDtypeStruct((A, D2, Mdl, D1, T), x.dtype),
            grid=grid,
            in_specs=[pl.BlockSpec((1, D1, 1, TC, T),
                                   lambda a, m, j: (a, 0, m, j, 0))],
            out_specs=pl.BlockSpec((1, TC, 1, D1, T),
                                   lambda a, m, j: (a, j, m, 0, 0)),
            compiler_params=_compiler_params(len(grid), block_bytes, vmem_cap),
            cost_estimate=_cost(nbytes),
        )(x5)
        return out5.reshape(out_shape)

    # ----- 6-D path: 2-D (D1 x D2) batched slab permute -------------------- #
    slab = P * W * isz               # one (P, W) plane in bytes

    # P-dimension fallback tiling when a single plane blows the block budget.
    TP = P
    if slab > max_block_bytes:
        cand = [d for d in _divisors(P)
                if (d % 8 == 0 or d == P) and d * W * isz <= max_block_bytes]
        if cand:
            TP = max(cand)
    slab_t = TP * W * isz

    # Maximize TC1*TC2 under the budget, preferring TC1 ~= TC2 so the minimum
    # contiguous HBM run on either side is as long as possible.
    budget_planes = max(1, max_block_bytes // slab_t)
    best = (1, 1)
    for tc2 in _divisors(D2):
        if tc2 > budget_planes:
            continue
        tc1 = _largest_divisor_leq(D1, budget_planes // tc2)
        if (tc1 * tc2 > best[0] * best[1]
                or (tc1 * tc2 == best[0] * best[1]
                    and abs(tc1 - tc2) < abs(best[0] - best[1]))):
            best = (tc1, tc2)
    TC1, TC2 = best

    # Guarantee enough parallel grid steps for multi-TC parts.
    if min_grid_steps > 1:
        while (A * (D1 // TC1) * Mdl * (D2 // TC2) * (P // TP)) < min_grid_steps:
            if TC2 >= TC1 and TC2 % 2 == 0:
                TC2 //= 2
            elif TC1 % 2 == 0:
                TC1 //= 2
            elif TC2 % 2 == 0:
                TC2 //= 2
            else:
                break

    block_bytes = TC1 * TC2 * slab_t

    x6 = x.reshape(A, D1, Mdl, D2, P, W)
    grid = (A, D1 // TC1, Mdl, D2 // TC2, P // TP)
    out6 = pl.pallas_call(
        _make_block_permute_kernel(TC1, TC2),
        out_shape=jax.ShapeDtypeStruct((A, D2, Mdl, D1, P, W), x.dtype),
        grid=grid,
        in_specs=[pl.BlockSpec((1, TC1, 1, TC2, TP, W),
                               lambda a, i, m, j, p: (a, i, m, j, p, 0))],
        out_specs=pl.BlockSpec((1, TC2, 1, TC1, TP, W),
                               lambda a, i, m, j, p: (a, j, m, i, p, 0)),
        compiler_params=_compiler_params(len(grid), block_bytes, vmem_cap),
        cost_estimate=_cost(nbytes),
    )(x6)
    return out6.reshape(out_shape)


# ----------------------------- case B (minor-axes swap) -------------------- #

def _transpose_minor(x, max_block_bytes, vmem_cap, min_grid_steps):
    shp = x.shape
    M, N = shp[-2], shp[-1]
    lead = shp[:-2]
    B = math.prod(lead) if lead else 1
    isz = jnp.dtype(x.dtype).itemsize
    nbytes = x.size * isz
    x3 = x.reshape(B, M, N)

    # 1024-wide tiles only when the (generation-aware) budget can afford them.
    tile_cands = (1024, 512, 256, 128) if max_block_bytes >= (4 << 20) \
        else (512, 256, 128)

    def pick_tile(n):
        for cand in tile_cands:
            if n % cand == 0:
                return cand
        return n                      # not 128-aligned -> take the full extent

    tm, tn = pick_tile(M), pick_tile(N)
    while tm * tn * isz > max_block_bytes:
        if tm > 128 and tm % 256 == 0:
            tm //= 2
        elif tn > 128 and tn % 256 == 0:
            tn //= 2
        else:
            break                     # can't shrink further (non-aligned plane)

    # Batch several small planes per grid step (small-input fast path).
    TB = _largest_divisor_leq(B, max(1, max_block_bytes // (tm * tn * isz)))

    # Multi-TensorCore parts need >= 2 grid steps to shard across cores.
    while (min_grid_steps > 1
           and (B // TB) * (M // tm) * (N // tn) < min_grid_steps):
        if TB % 2 == 0:
            TB //= 2
        elif tm > 128 and tm % 256 == 0:
            tm //= 2
        elif tn > 128 and tn % 256 == 0:
            tn //= 2
        else:
            break

    block_bytes = TB * tm * tn * isz
    grid = (B // TB, M // tm, N // tn)
    out3 = pl.pallas_call(
        _minor_transpose_kernel,
        out_shape=jax.ShapeDtypeStruct((B, N, M), x.dtype),
        grid=grid,
        in_specs=[pl.BlockSpec((TB, tm, tn), lambda b, i, j: (b, i, j))],
        out_specs=pl.BlockSpec((TB, tn, tm), lambda b, i, j: (b, j, i)),
        compiler_params=_compiler_params(len(grid), block_bytes, vmem_cap),
        cost_estimate=_cost(nbytes),
    )(x3)
    return out3.reshape(lead + (N, M))


# ----------------------------- wrapper ------------------------------------- #

def transpose_pallas(x, dim1=0, dim2=1, *, max_block_bytes=None):
    """Pallas equivalent of torch.transpose(x, dim1, dim2)."""
    nd = x.ndim
    d1 = dim1 % nd
    d2 = dim2 % nd
    if d1 == d2:
        return x
    d1, d2 = sorted((d1, d2))

    gp = _gen_params()
    if max_block_bytes is None:
        max_block_bytes = gp["block_bytes"]
    vmem_cap = gp["vmem_cap"]
    min_grid_steps = gp["min_grid_steps"]

    out_shape = list(x.shape)
    out_shape[d1], out_shape[d2] = out_shape[d2], out_shape[d1]
    out_shape = tuple(out_shape)

    if d1 == nd - 2 and d2 == nd - 1:
        return _transpose_minor(x, max_block_bytes, vmem_cap, min_grid_steps)
    elif d2 <= nd - 2:
        return _transpose_major(x, d1, d2, out_shape, max_block_bytes,
                                vmem_cap, min_grid_steps)
    else:
        # TODO(synk): swapping the last (lane) axis with a non-adjacent leading
        # axis (a lane-dim-changing permute) is not implemented as a single
        # Pallas kernel; not needed for TransposeLayer's default (0, 1).
        raise NotImplementedError(
            "transpose_pallas: swapping the last axis with a non-adjacent "
            "axis is not implemented")


class TransposeLayer:
    """Drop-in forward-pass equivalent of the PyTorch TransposeLayer."""

    def __init__(self, dim1=0, dim2=1):
        self.dim1, self.dim2 = dim1, dim2

    def __call__(self, x):
        return transpose_pallas(x, self.dim1, self.dim2)


# ------------------------------- demo -------------------------------------- #

if __name__ == "__main__":
    key = jax.random.PRNGKey(0)

    # NCHW feature map, as fed to TransposeLayer() in waveEquation/ml.py.
    x = jax.random.normal(key, (2, 4, 16, 16), dtype=jnp.float32)

    # TransposeLayer() default: dim1=0, dim2=1  ->  (4, 2, 16, 16)
    layer = TransposeLayer()
    y = jax.block_until_ready(layer(x))
    ref = jnp.swapaxes(x, 0, 1)
    assert y.shape == ref.shape and y.dtype == ref.dtype
    assert bool(jnp.array_equal(y, ref))

    # Minor-axes transpose (TransposeLayer(2, 3)).
    y2 = jax.block_until_ready(transpose_pallas(x, 2, 3))
    assert bool(jnp.array_equal(y2, jnp.swapaxes(x, 2, 3)))

    # Swap with the second-minor axis (TransposeLayer(1, 2)): exercises the
    # 2-D batched (TC1, TC2) free-reshape path.
    y3 = jax.block_until_ready(transpose_pallas(x, 1, 2))
    assert bool(jnp.array_equal(y3, jnp.swapaxes(x, 1, 2)))

    # Lane-dense trailing dim + multi-step grid: exercises D2 chunking in the
    # 6-D path (block budget shrunk to force it).
    xa = jax.random.normal(key, (2, 8, 4, 128), dtype=jnp.float32)
    ya = jax.block_until_ready(transpose_pallas(xa, 0, 1, max_block_bytes=4096))
    assert bool(jnp.array_equal(ya, jnp.swapaxes(xa, 0, 1)))

    # Both batched dims > 1: exercises the in-kernel slab-permute copies.
    xc = jax.random.normal(key, (4, 8, 4, 16), dtype=jnp.float32)
    yc = jax.block_until_ready(transpose_pallas(xc, 0, 1))
    assert bool(jnp.array_equal(yc, jnp.swapaxes(xc, 0, 1)))

    # Oversized plane vs budget: exercises the P-dimension tiling fallback.
    xp = jax.random.normal(key, (2, 2, 64, 128), dtype=jnp.float32)
    yp = jax.block_until_ready(
        transpose_pallas(xp, 0, 1, max_block_bytes=16 * 1024))
    assert bool(jnp.array_equal(yp, jnp.swapaxes(xp, 0, 1)))

    # 128-aligned plane: exercises the tiled minor-transpose path.
    xb = jax.random.normal(key, (2, 256, 256), dtype=jnp.float32)
    yb = jax.block_until_ready(
        transpose_pallas(xb, 1, 2, max_block_bytes=64 * 1024))
    assert bool(jnp.array_equal(yb, jnp.swapaxes(xb, 1, 2)))

    print("KERNEL_OK")
</pallas_src>

<mosaic_0001>
module attributes {stable_mosaic.version = 11 : i64} {
  func.func @kernel(%arg0: i32, %arg1: i32, %arg2: i32, %arg3: memref<1x2x1x4x256xf32, #tpu.memory_space<vmem>>, %arg4: memref<1x4x1x2x256xf32, #tpu.memory_space<vmem>>) attributes {dimension_semantics = [#tpu.dimension_semantics<parallel>, #tpu.dimension_semantics<parallel>, #tpu.dimension_semantics<parallel>], iteration_bounds = array<i64: 1, 1, 1>, scalar_prefetch = 0 : i64, scratch_operands = 0 : i64, tpu.core_type = #tpu.core_type<tc>, window_params = [{transform_indices = @transform_0, window_bounds = array<i64: 1, 2, 1, 4, 256>}, {transform_indices = @transform_1, window_bounds = array<i64: 1, 4, 1, 2, 256>}]} {
    %c0 = arith.constant 0 : index
    %c0_0 = arith.constant 0 : index
    %c0_1 = arith.constant 0 : index
    %c0_2 = arith.constant 0 : index
    %c0_3 = arith.constant 0 : index
    %0 = vector.load %arg3[%c0, %c0_0, %c0_1, %c0_2, %c0_3] : memref<1x2x1x4x256xf32, #tpu.memory_space<vmem>>, vector<1x1x1x4x256xf32>
    %1 = vector.shape_cast %0 : vector<1x1x1x4x256xf32> to vector<4x256xf32>
    %c0_4 = arith.constant 0 : index
    %c0_5 = arith.constant 0 : index
    %c0_6 = arith.constant 0 : index
    %c0_7 = arith.constant 0 : index
    %c0_8 = arith.constant 0 : index
    %2 = vector.load %arg4[%c0_4, %c0_5, %c0_6, %c0_7, %c0_8] : memref<1x4x1x2x256xf32, #tpu.memory_space<vmem>>, vector<1x4x1x1x256xf32>
    %3 = vector.shape_cast %2 : vector<1x4x1x1x256xf32> to vector<4x256xf32>
    %4 = vector.shape_cast %1 : vector<4x256xf32> to vector<1x4x1x1x256xf32>
    tpu.vector_store %arg4[%c0_4, %c0_5, %c0_6, %c0_7, %c0_8], %4 {strides = array<i32>} : memref<1x4x1x2x256xf32, #tpu.memory_space<vmem>>, vector<1x4x1x1x256xf32>,
    %c0_9 = arith.constant 0 : index
    %c1 = arith.constant 1 : index
    %c0_10 = arith.constant 0 : index
    %c0_11 = arith.constant 0 : index
    %c0_12 = arith.constant 0 : index
    %5 = vector.load %arg3[%c0_9, %c1, %c0_10, %c0_11, %c0_12] : memref<1x2x1x4x256xf32, #tpu.memory_space<vmem>>, vector<1x1x1x4x256xf32>
    %6 = vector.shape_cast %5 : vector<1x1x1x4x256xf32> to vector<4x256xf32>
    %c0_13 = arith.constant 0 : index
    %c0_14 = arith.constant 0 : index
    %c0_15 = arith.constant 0 : index
    %c1_16 = arith.constant 1 : index
    %c0_17 = arith.constant 0 : index
    %7 = vector.load %arg4[%c0_13, %c0_14, %c0_15, %c1_16, %c0_17] : memref<1x4x1x2x256xf32, #tpu.memory_space<vmem>>, vector<1x4x1x1x256xf32>
    %8 = vector.shape_cast %7 : vector<1x4x1x1x256xf32> to vector<4x256xf32>
    %9 = vector.shape_cast %6 : vector<4x256xf32> to vector<1x4x1x1x256xf32>
    tpu.vector_store %arg4[%c0_13, %c0_14, %c0_15, %c1_16, %c0_17], %9 {strides = array<i32>} : memref<1x4x1x2x256xf32, #tpu.memory_space<vmem>>, vector<1x4x1x1x256xf32>,
    return
  }
  func.func @transform_0(%arg0: i32, %arg1: i32, %arg2: i32) -> (i32, i32, i32, i32, i32) {
    %c0_i32 = arith.constant 0 : i32
    %c0_i32_0 = arith.constant 0 : i32
    %c0_i32_1 = arith.constant 0 : i32
    return %arg0, %c0_i32, %arg1, %arg2, %c0_i32_0 : i32, i32, i32, i32, i32
  }
  func.func @transform_1(%arg0: i32, %arg1: i32, %arg2: i32) -> (i32, i32, i32, i32, i32) {
    %c0_i32 = arith.constant 0 : i32
    %c0_i32_0 = arith.constant 0 : i32
    %c0_i32_1 = arith.constant 0 : i32
    return %arg0, %arg2, %arg1, %c0_i32, %c0_i32_0 : i32, i32, i32, i32, i32
  }
}

</mosaic_0001>

<llo_original>
// kernel: tpu_custom_call.1
$region0: #{tpu_custom_call.1}
  #allocation0 [shape = 'u32[]', space=smem, size = 0x4, offset = 0x4, fixed_abs, tag = 'smem constant byte address 0x4 - core index']
  #allocation1 [shape = 'u32[144,128]{1,0:T(1,128)}', space=vmem, size = 0x12000, scoped, tag = 'internal scratch']
  %s0 = inlined_call_operand.hbm [shape: f32[1,2,1,4,256], index: 0, kind: input, shape index: {}]
  %s1 = inlined_call_operand.hbm [shape: f32[1,4,1,2,256], index: 1, kind: output, shape index: {}]
  %s2 = sld [smem:[#allocation0]]
  $region18: #{tpu_custom_call.1} parent=0
    _
  %s4 = ssub.s32 1, %s2
  %s5 = scalar_select 0, %s4, %s2
  $region1: #{tpu_custom_call.1} parent=0
    #allocation2 [shape = 'u8[8192]{0}', space=vmem, size = 0x2000, scoped, tag = 'input window, operand 0, single buffered']
    #allocation3 [shape = 's32[1]{0}', space=sflag, size = 0x4, scoped, tag = 'scoped memory for tpu_custom_call.1']
    #allocation4 [shape = 's32[1]{0}', space=sflag, size = 0x4, scoped, tag = 'scoped memory for tpu_custom_call.1']
    #allocation5 [shape = 'u8[8192]{0}', space=vmem, size = 0x2000, scoped, tag = 'output window, operand 0, single buffered']
    %6 = vsyncpa [#allocation3], 0
    %7 = vsyncpa [#allocation4], 0
    // Predicated region
    $region2: #{tpu_custom_call.1} parent=1 // pred_check
      _
    $region3: #{tpu_custom_call.1} parent=1 // pred_check_branch
      %9 = sbr.rel (0) target = $region5
    $region4: #{tpu_custom_call.1} parent=1 // pred_region
      %s11 = ssub.s32 256, 256
      %12 = vsyncadd [#allocation3], %s11
      %s13 = sshll.u32 [#allocation2], 4
      %s14 = int_to_ptr.vmem [resolvable:$true] %s13
      %19 = dma.hbm_to_vmem [thread:$0]  %s0, 256, %s14, [#allocation3], 128, 128, 8
    $region5: #{tpu_custom_call.1} parent=1 // pred_fallthru
      _
    // Predicated region
    $region6: #{tpu_custom_call.1} parent=1 // pred_check
      _
    $region7: #{tpu_custom_call.1} parent=1 // pred_check_branch
      %21 = sbr.rel (0) target = $region9
    $region8: #{tpu_custom_call.1} parent=1 // pred_region
      %22 = dma.done [#allocation3], 256
    $region9: #{tpu_custom_call.1} parent=1 // pred_fallthru
      _
    %v23 = vld [vmem:[#allocation2] sm:$0xff]
    %v26 = vunpack.c.l.s4 1966171168
    %v27 = vunpack.c.0.s8 %v26
    %v28 = vlaneseq
    %v29 = vshrl.u32 %v28, 7
    %v30 = vsub.s32 %v27, %v29
    %v31 = vrot.slane %v23, %v30
    %v32 = vcombine.high %v31, %v31
    %v34 = vunpack.c.l.s4 1966171168
    %v35 = vunpack.c.0.s8 %v34
    %v36 = vlaneseq
    %v37 = vshrl.u32 %v36, 7
    %v38 = vsub.s32 %v35, %v37
    %v39 = vrot.slane %v31, %v38
    %v41 = vunpack.c.l.s4 1966171168
    %v42 = vunpack.c.0.s8 %v41
    %v43 = vlaneseq
    %v44 = vshrl.u32 %v43, 7
    %v45 = vsub.s32 %v42, %v44
    %v46 = vrot.slane %v32, %v45
    %v47 = vcombine.high %v39, %v39
    %v48 = vcombine.high %v46, %v46
    %v53 = vlaneseq
    %vm54 = vcmp.ge.s32.totalorder %v53, 0
    %vm55 = vcmp.lt.s32.totalorder %v53, 256
    %vm56 = vmand %vm54, %vm55
    %57 = vst.msk [vmem:[#allocation5] ss:$2 sm:$0x3] %vm56, %v39
    %s58 = scalar_lea.vmem [#allocation5], 4
    %59 = vst.msk [vmem:[%s58] ss:$2 sm:$0x3] %vm56, %v46
    %s60 = scalar_lea.vmem [#allocation5], 8
    %61 = vst.msk [vmem:[%s60] ss:$2 sm:$0x3] %vm56, %v47
    %s62 = scalar_lea.vmem [#allocation5], 12
    %63 = vst.msk [vmem:[%s62] ss:$2 sm:$0x3] %vm56, %v48
    %s64 = scalar_lea.vmem [#allocation2], 8
    %v65 = vld [vmem:[%s64] sm:$0xff]
    %v68 = vunpack.c.l.s4 1966171168
    %v69 = vunpack.c.0.s8 %v68
    %v70 = vlaneseq
    %v71 = vshrl.u32 %v70, 7
    %v72 = vsub.s32 %v69, %v71
    %v73 = vrot.slane %v65, %v72
    %v74 = vcombine.high %v73, %v73
    %v76 = vunpack.c.l.s4 1966171168
    %v77 = vunpack.c.0.s8 %v76
    %v78 = vlaneseq
    %v79 = vshrl.u32 %v78, 7
    %v80 = vsub.s32 %v77, %v79
    %v81 = vrot.slane %v73, %v80
    %v83 = vunpack.c.l.s4 1966171168
    %v84 = vunpack.c.0.s8 %v83
    %v85 = vlaneseq
    %v86 = vshrl.u32 %v85, 7
    %v87 = vsub.s32 %v84, %v86
    %v88 = vrot.slane %v74, %v87
    %v89 = vcombine.high %v81, %v81
    %v90 = vcombine.high %v88, %v88
    %s95 = scalar_lea.vmem [#allocation5], 1
    %96 = vst.msk [vmem:[%s95] ss:$2 sm:$0x3] %vm56, %v81
    %s97 = scalar_lea.vmem [#allocation5], 5
    %98 = vst.msk [vmem:[%s97] ss:$2 sm:$0x3] %vm56, %v88
    %s99 = scalar_lea.vmem [#allocation5], 9
    %100 = vst.msk [vmem:[%s99] ss:$2 sm:$0x3] %vm56, %v89
    %s101 = scalar_lea.vmem [#allocation5], 13
    %102 = vst.msk [vmem:[%s101] ss:$2 sm:$0x3] %vm56, %v90
    // Predicated region
    $region10: #{tpu_custom_call.1} parent=1 // pred_check
      _
    $region11: #{tpu_custom_call.1} parent=1 // pred_check_branch
      %104 = sbr.rel (0) target = $region13
    $region12: #{tpu_custom_call.1} parent=1 // pred_region
      %s106 = ssub.s32 256, 256
      %107 = vsyncadd [#allocation4], %s106
      %s108 = sshll.u32 [#allocation5], 4
      %s109 = int_to_ptr.vmem [resolvable:$true] %s108
      %114 = dma.vmem_to_hbm [thread:$0]  %s109, 256, %s1, [#allocation4], 64, 64, 4
    $region13: #{tpu_custom_call.1} parent=1 // pred_fallthru
      _
    // Predicated region
    $region14: #{tpu_custom_call.1} parent=1 // pred_check
      _
    $region15: #{tpu_custom_call.1} parent=1 // pred_check_branch
      %116 = sbr.rel (0) target = $region17
    $region16: #{tpu_custom_call.1} parent=1 // pred_region
      %117 = dma.done [#allocation4], 256
    $region17: #{tpu_custom_call.1} parent=1 // pred_fallthru
      _
    %118 = vsyncpa [#allocation3], 1
    %119 = vsyncpa [#allocation4], 1

</llo_original>
